<compile_context>
chip_gen: v5e
topology: v5e:2x2
jax: 0.10.0
libtpu: 0.0.40
codegen_flags: <defaults>
</compile_context>

<pallas_src>
import functools

import jax
import jax.numpy as jnp
from jax.experimental import pallas as pl
from jax.experimental.pallas import tpu as pltpu


def _attention2d_kernel(x_ref, w1_ref, w2_ref, b2_ref, o_ref, acc_ref, *, hw, t_hw):
    # x_ref  : VMEM (tb, C, t_hw)  native dtype -- streamed spatial tile
    # w1_ref : VMEM (C, H1)  f32   -- fc1 weight, pre-scaled by 1/(H*W)
    # w2_ref : VMEM (H1, K)  f32   -- fc2 weight, pre-scaled by 1/temperature
    # b2_ref : VMEM (1, K)   f32   -- fc2 bias,  pre-scaled by 1/temperature
    # o_ref  : VMEM (tb, K)  f32   -- softmax output (resident across spatial axis)
    # acc_ref: VMEM (tb, C)  f32   -- running spatial sum (pool accumulator)
    s = pl.program_id(1)
    last = pl.num_programs(1) - 1

    @pl.when(s == 0)
    def _init():
        acc_ref[...] = jnp.zeros_like(acc_ref)

    def _accumulate(mask_partial):
        xf = x_ref[...].astype(jnp.float32)                     # (tb, C, t_hw)
        if mask_partial:
            lane = jax.lax.broadcasted_iota(jnp.int32, xf.shape, dimension=2)
            xf = jnp.where(s * t_hw + lane < hw, xf, 0.0)
        acc_ref[...] += jnp.sum(xf, axis=-1)                    # (tb, C)

    if hw % t_hw != 0:
        # Only the last spatial tile is partial: mask there, fast path everywhere else.
        @pl.when(s < last)
        def _full_tile():
            _accumulate(False)

        @pl.when(s == last)
        def _partial_tile():
            _accumulate(True)
    else:
        _accumulate(False)

    @pl.when(s == last)
    def _finalize():
        # Avg-pool divide and temperature are already folded into the weights/bias.
        pooled = acc_ref[...]                                                # (tb, C)
        h = jnp.dot(pooled, w1_ref[...], preferred_element_type=jnp.float32)
        h = jnp.maximum(h, 0.0)                                              # (tb, H1)
        logits = jnp.dot(h, w2_ref[...], preferred_element_type=jnp.float32)
        logits = logits + b2_ref[...]                                        # (tb, K)
        z = logits - jnp.max(logits, axis=-1, keepdims=True)
        e = jnp.exp(z)
        o_ref[...] = (e / jnp.sum(e, axis=-1, keepdims=True)).astype(o_ref.dtype)


# Per-grid-step padded-byte target: large enough to hide the ~0.35 us/step overhead at
# HBM roofline, small enough that two double-buffered tiles fit comfortably in VMEM.
_PER_STEP_BYTES_TARGET = 8 * 1024 * 1024


def _pick_tb(B, max_tb):
    """Largest divisor of B <= max_tb, preferring multiples of 8 (or B itself) so the
    output block's second-minor dim stays sublane-aligned."""
    cands = [d for d in range(1, min(B, max(1, max_tb)) + 1) if B % d == 0]
    aligned = [d for d in cands if d % 8 == 0 or d == B]
    return max(aligned) if aligned else max(cands)


def _choose_tiles(B, C, HW, itemsize):
    sub_granule = 8 * max(1, 4 // itemsize)          # f32: 8, bf16: 16, int8: 32
    pad_c = -(-C // sub_granule) * sub_granule       # VMEM sublane padding of C
    hw_pad = -(-HW // 128) * 128                     # lane padding of HW
    row_bytes = pad_c * hw_pad * itemsize            # one batch element, full HW, padded

    if row_bytes >= _PER_STEP_BYTES_TARGET:
        # A single batch element is already big: tile the spatial axis, tb = 1.
        tb = 1
        t_hw = (_PER_STEP_BYTES_TARGET // (pad_c * itemsize)) // 128 * 128
        t_hw = max(128, t_hw)
        if t_hw >= HW:
            t_hw = HW
    else:
        # Take the full spatial extent and grow the batch tile to hit the byte target.
        t_hw = HW
        tb = _pick_tb(B, _PER_STEP_BYTES_TARGET // row_bytes)
    return tb, t_hw


def attention2d_forward(x_nchw, w1, w2, b2, temperature, *, t_hw=None, tb=None):
    """x_nchw: (B, C, H, W); w1: (C, H1); w2: (H1, K); b2: (K,)."""
    B, C, H, W = x_nchw.shape
    HW = H * W
    H1 = w1.shape[1]
    K = w2.shape[1]
    itemsize = jnp.dtype(x_nchw.dtype).itemsize

    # (B, C, H, W) -> (B, C, HW): contiguous reshape, native dtype on the wire.
    x_flat = x_nchw.reshape(B, C, HW)

    auto_tb, auto_thw = _choose_tiles(B, C, HW, itemsize)
    if tb is None:
        tb = auto_tb
    if t_hw is None:
        t_hw = auto_thw
    assert B % tb == 0, "batch tile must divide B"
    assert t_hw == HW or (t_hw % 128 == 0 and t_hw <= HW), "t_hw must be full HW or a multiple of 128"

    grid = (B // tb, pl.cdiv(HW, t_hw))

    # Fold the constant scalings into the (tiny) weights on the host.
    inv_hw = 1.0 / float(HW)
    inv_t = 1.0 / float(temperature)
    w1_s = (w1 * inv_hw).astype(jnp.float32)       # absorbs the avg-pool divide
    w2_s = (w2 * inv_t).astype(jnp.float32)        # absorbs the temperature
    b2_s = (b2 * inv_t).reshape(1, K).astype(jnp.float32)

    kernel = functools.partial(_attention2d_kernel, hw=HW, t_hw=t_hw)

    cost = pl.CostEstimate(
        flops=B * C * HW + 2 * B * C * H1 + 2 * B * H1 * K + 5 * B * K,
        transcendentals=B * K,
        bytes_accessed=x_flat.size * itemsize + (C * H1 + H1 * K + K + B * K) * 4,
    )

    return pl.pallas_call(
        kernel,
        out_shape=jax.ShapeDtypeStruct((B, K), jnp.float32),
        grid=grid,
        in_specs=[
            pl.BlockSpec((tb, C, t_hw), lambda b, s: (b, 0, s)),   # x: streamed tiles
            pl.BlockSpec((C, H1), lambda b, s: (0, 0)),            # w1 (resident)
            pl.BlockSpec((H1, K), lambda b, s: (0, 0)),            # w2 (resident)
            pl.BlockSpec((1, K), lambda b, s: (0, 0)),             # b2 (resident)
        ],
        out_specs=pl.BlockSpec((tb, K), lambda b, s: (b, 0)),      # same block across s
        scratch_shapes=[pltpu.VMEM((tb, C), jnp.float32)],         # pooled-sum accumulator
        compiler_params=pltpu.CompilerParams(
            dimension_semantics=("parallel", "arbitrary"),
            vmem_limit_bytes=40 * 1024 * 1024,
        ),
        cost_estimate=cost,
    )(x_flat, w1_s, w2_s, b2_s)


def init_attention2d_params(key, in_planes, ratios, num_kernel):
    """Deterministic kaiming_normal_(mode='fan_out', nonlinearity='relu') init."""
    if in_planes != 3:
        hidden_planes = int(in_planes * ratios) + 1
    else:
        hidden_planes = num_kernel
    k1, k2 = jax.random.split(key)
    # fan_out of a 1x1 conv == out_channels; gain for relu == sqrt(2).
    std1 = (2.0 / hidden_planes) ** 0.5
    std2 = (2.0 / num_kernel) ** 0.5
    # PyTorch conv weight is (out, in, 1, 1); we store the equivalent (in, out) matrix.
    w1 = std1 * jax.random.normal(k1, (in_planes, hidden_planes), dtype=jnp.float32)
    w2 = std2 * jax.random.normal(k2, (hidden_planes, num_kernel), dtype=jnp.float32)
    b2 = jnp.zeros((num_kernel,), dtype=jnp.float32)
    return w1, w2, b2


if __name__ == "__main__":
    key = jax.random.PRNGKey(0)
    kx, kp = jax.random.split(key)

    B, C, H, W = 2, 4, 16, 16      # in_planes = 4
    ratios = 0.25                  # hidden_planes = int(4 * 0.25) + 1 = 2
    num_kernel = 4
    temperature = 2.0

    x = jax.random.normal(kx, (B, C, H, W), dtype=jnp.float32)
    w1, w2, b2 = init_attention2d_params(kp, C, ratios, num_kernel)

    # Pure-JAX reference.
    pooled = jnp.mean(x, axis=(2, 3))                     # (B, C)
    h = jnp.maximum(pooled @ w1, 0.0)                     # (B, H1)
    logits = h @ w2 + b2                                  # (B, K)
    ref = jax.nn.softmax(logits / temperature, axis=1)

    # Path 1: forced t_hw=128 so the small demo exercises the multi-step spatial
    # reduction (accumulator) path.
    out_multi = attention2d_forward(x, w1, w2, b2, temperature, t_hw=128)
    out_multi = jax.block_until_ready(out_multi)
    assert out_multi.shape == (B, num_kernel)
    assert jnp.allclose(out_multi, ref, atol=1e-5, rtol=1e-5), (out_multi, ref)

    # Path 2: default auto-tiling (single spatial step, full-HW tile).
    out_auto = attention2d_forward(x, w1, w2, b2, temperature)
    out_auto = jax.block_until_ready(out_auto)
    assert out_auto.shape == (B, num_kernel)
    assert jnp.allclose(out_auto, ref, atol=1e-5, rtol=1e-5), (out_auto, ref)

    print("KERNEL_OK")
</pallas_src>

<mosaic_0001>
module attributes {stable_mosaic.version = 11 : i64} {
  func.func @_attention2d_kernel(%arg0: i32, %arg1: i32, %arg2: memref<2x4x128xf32, #tpu.memory_space<vmem>>, %arg3: memref<4x2xf32, #tpu.memory_space<vmem>>, %arg4: memref<2x4xf32, #tpu.memory_space<vmem>>, %arg5: memref<1x4xf32, #tpu.memory_space<vmem>>, %arg6: memref<2x4xf32, #tpu.memory_space<vmem>>, %arg7: memref<2x4xf32, #tpu.memory_space<vmem>>) attributes {dimension_semantics = [#tpu.dimension_semantics<parallel>, #tpu.dimension_semantics<arbitrary>], iteration_bounds = array<i64: 1, 2>, scalar_prefetch = 0 : i64, scratch_operands = 1 : i64, tpu.core_type = #tpu.core_type<tc>, window_params = [{transform_indices = @transform_0, window_bounds = array<i64: 2, 4, 128>}, {pipeline_mode = #tpu.pipeline_mode<synchronous>, transform_indices = @transform_1, window_bounds = array<i64: 4, 2>}, {pipeline_mode = #tpu.pipeline_mode<synchronous>, transform_indices = @transform_2, window_bounds = array<i64: 2, 4>}, {pipeline_mode = #tpu.pipeline_mode<synchronous>, transform_indices = @transform_3, window_bounds = array<i64: 1, 4>}, {transform_indices = @transform_4, window_bounds = array<i64: 2, 4>}]} {
    %c0_i32 = arith.constant 0 : i32
    %0 = arith.cmpi eq, %arg1, %c0_i32 : i32
    %1 = arith.extui %0 : i1 to i32
    %c0_i32_0 = arith.constant 0 : i32
    %2 = arith.cmpi ne, %1, %c0_i32_0 : i32
    scf.if %2 {
      %cst_8 = arith.constant 0.000000e+00 : f32
      %11 = vector.broadcast %cst_8 : f32 to vector<2x4xf32>
      %c0_9 = arith.constant 0 : index
      %c0_10 = arith.constant 0 : index
      %12 = vector.load %arg7[%c0_9, %c0_10] : memref<2x4xf32, #tpu.memory_space<vmem>>, vector<2x4xf32>
      tpu.vector_store %arg7[%c0_9, %c0_10], %11 {strides = array<i32>} : memref<2x4xf32, #tpu.memory_space<vmem>>, vector<2x4xf32>,
    } else {
    }
    %c0 = arith.constant 0 : index
    %c0_1 = arith.constant 0 : index
    %c0_2 = arith.constant 0 : index
    %3 = vector.load %arg2[%c0, %c0_1, %c0_2] : memref<2x4x128xf32, #tpu.memory_space<vmem>>, vector<2x4x128xf32>
    %c0_3 = arith.constant 0 : index
    %c0_4 = arith.constant 0 : index
    %4 = vector.load %arg7[%c0_3, %c0_4] : memref<2x4xf32, #tpu.memory_space<vmem>>, vector<2x4xf32>
    %cst = arith.constant dense<0.000000e+00> : vector<2x4xf32>
    %5 = vector.multi_reduction <add>, %3, %cst [2] : vector<2x4x128xf32> to vector<2x4xf32>
    %6 = arith.addf %4, %5 : vector<2x4xf32>
    %c0_5 = arith.constant 0 : index
    %c0_6 = arith.constant 0 : index
    %7 = vector.load %arg7[%c0_5, %c0_6] : memref<2x4xf32, #tpu.memory_space<vmem>>, vector<2x4xf32>
    tpu.vector_store %arg7[%c0_5, %c0_6], %6 {strides = array<i32>} : memref<2x4xf32, #tpu.memory_space<vmem>>, vector<2x4xf32>,
    %c1_i32 = arith.constant 1 : i32
    %8 = arith.cmpi eq, %arg1, %c1_i32 : i32
    %9 = arith.extui %8 : i1 to i32
    %c0_i32_7 = arith.constant 0 : i32
    %10 = arith.cmpi ne, %9, %c0_i32_7 : i32
    scf.if %10 {
      %c0_8 = arith.constant 0 : index
      %c0_9 = arith.constant 0 : index
      %11 = vector.load %arg7[%c0_8, %c0_9] : memref<2x4xf32, #tpu.memory_space<vmem>>, vector<2x4xf32>
      %c0_10 = arith.constant 0 : index
      %c0_11 = arith.constant 0 : index
      %12 = vector.load %arg3[%c0_10, %c0_11] : memref<4x2xf32, #tpu.memory_space<vmem>>, vector<4x2xf32>
      %cst_12 = arith.constant dense<0.000000e+00> : vector<2x2xf32>
      %13 = tpu.matmul %11, %12, %cst_12 {dimension_numbers = #tpu.dot_dimension_numbers<[1], [0], [0], [1], [0, 0, 1, 1], [], []>} : vector<2x4xf32>, vector<4x2xf32>, vector<2x2xf32> -> vector<2x2xf32>
      %cst_13 = arith.constant 0.000000e+00 : f32
      %14 = vector.broadcast %cst_13 : f32 to vector<2x2xf32>
      %15 = arith.maximumf %13, %14 : vector<2x2xf32>
      %c0_14 = arith.constant 0 : index
      %c0_15 = arith.constant 0 : index
      %16 = vector.load %arg4[%c0_14, %c0_15] : memref<2x4xf32, #tpu.memory_space<vmem>>, vector<2x4xf32>
      %cst_16 = arith.constant dense<0.000000e+00> : vector<2x4xf32>
      %17 = tpu.matmul %15, %16, %cst_16 {dimension_numbers = #tpu.dot_dimension_numbers<[1], [0], [0], [1], [0, 0, 1, 1], [], []>} : vector<2x2xf32>, vector<2x4xf32>, vector<2x4xf32> -> vector<2x4xf32>
      %c0_17 = arith.constant 0 : index
      %c0_18 = arith.constant 0 : index
      %18 = vector.load %arg5[%c0_17, %c0_18] : memref<1x4xf32, #tpu.memory_space<vmem>>, vector<1x4xf32>
      %19 = vector.broadcast %18 : vector<1x4xf32> to vector<2x4xf32>
      %20 = arith.addf %17, %19 : vector<2x4xf32>
      %cst_19 = arith.constant dense<0xFF800000> : vector<2xf32>
      %21 = vector.multi_reduction <maximumf>, %20, %cst_19 [1] : vector<2x4xf32> to vector<2xf32>
      %22 = vector.shape_cast %21 : vector<2xf32> to vector<2x1xf32>
      %23 = vector.broadcast %22 : vector<2x1xf32> to vector<2x4xf32>
      %24 = arith.subf %20, %23 : vector<2x4xf32>
      %25 = math.exp %24 : vector<2x4xf32>
      %cst_20 = arith.constant dense<0.000000e+00> : vector<2xf32>
      %26 = vector.multi_reduction <add>, %25, %cst_20 [1] : vector<2x4xf32> to vector<2xf32>
      %27 = vector.shape_cast %26 : vector<2xf32> to vector<2x1xf32>
      %28 = vector.broadcast %27 : vector<2x1xf32> to vector<2x4xf32>
      %29 = arith.divf %25, %28 : vector<2x4xf32>
      %c0_21 = arith.constant 0 : index
      %c0_22 = arith.constant 0 : index
      %30 = vector.load %arg6[%c0_21, %c0_22] : memref<2x4xf32, #tpu.memory_space<vmem>>, vector<2x4xf32>
      tpu.vector_store %arg6[%c0_21, %c0_22], %29 {strides = array<i32>} : memref<2x4xf32, #tpu.memory_space<vmem>>, vector<2x4xf32>,
    } else {
    }
    return
  }
  func.func @transform_0(%arg0: i32, %arg1: i32) -> (i32, i32, i32) {
    %c0_i32 = arith.constant 0 : i32
    %c0_i32_0 = arith.constant 0 : i32
    return %arg0, %c0_i32, %arg1 : i32, i32, i32
  }
  func.func @transform_1(%arg0: i32, %arg1: i32) -> (i32, i32) {
    %c0_i32 = arith.constant 0 : i32
    %c0_i32_0 = arith.constant 0 : i32
    %c0_i32_1 = arith.constant 0 : i32
    return %c0_i32, %c0_i32_0 : i32, i32
  }
  func.func @transform_2(%arg0: i32, %arg1: i32) -> (i32, i32) {
    %c0_i32 = arith.constant 0 : i32
    %c0_i32_0 = arith.constant 0 : i32
    %c0_i32_1 = arith.constant 0 : i32
    return %c0_i32, %c0_i32_0 : i32, i32
  }
  func.func @transform_3(%arg0: i32, %arg1: i32) -> (i32, i32) {
    %c0_i32 = arith.constant 0 : i32
    %c0_i32_0 = arith.constant 0 : i32
    %c0_i32_1 = arith.constant 0 : i32
    return %c0_i32, %c0_i32_0 : i32, i32
  }
  func.func @transform_4(%arg0: i32, %arg1: i32) -> (i32, i32) {
    %c0_i32 = arith.constant 0 : i32
    %c0_i32_0 = arith.constant 0 : i32
    return %arg0, %c0_i32 : i32, i32
  }
}

</mosaic_0001>

<llo_original>
// kernel: tpu_custom_call.1
$region0: #{tpu_custom_call.1}
  #allocation0 [shape = 'u32[]', space=smem, size = 0x4, offset = 0x4, fixed_abs, tag = 'smem constant byte address 0x4 - core index']
  #allocation1 [shape = 'u32[72,128]{1,0:T(1,128)}', space=vmem, size = 0x9000, scoped, tag = 'internal scratch']
  #allocation2 [shape = 'f32[2,4]{1,0:T(2,128)}', space=vmem, size = 0x400, scoped, tag = 'scratch operand']
  %s0 = inlined_call_operand.hbm [shape: f32[2,4,256], index: 0, kind: input, shape index: {}]
  %s1 = inlined_call_operand.vmem [shape: f32[4,2], index: 1, kind: input, shape index: {}]
  %s2 = inlined_call_operand.vmem [shape: f32[2,4], index: 2, kind: input, shape index: {}]
  %s3 = inlined_call_operand.vmem [shape: f32[1,4], index: 3, kind: input, shape index: {}]
  %s4 = inlined_call_operand.hbm [shape: f32[2,4], index: 4, kind: output, shape index: {}]
  %s5 = sld [smem:[#allocation0]]
  $region61: #{tpu_custom_call.1} parent=0
    _
  %s7 = ssub.s32 1, %s5
  %s8 = scalar_select 0, %s7, %s5
  $region1: #{tpu_custom_call.1} parent=0
    #allocation3 [shape = 'u8[8192]{0}', space=vmem, size = 0x2000, scoped, tag = 'input window, operand 0']
    #allocation4 [shape = 's32[2]{0}', space=sflag, size = 0x8, scoped, tag = 'scoped memory for tpu_custom_call.1']
    #allocation5 [shape = 's32[2]{0}', space=sflag, size = 0x8, scoped, tag = 'scoped memory for tpu_custom_call.1']
    #allocation6 [shape = 'u8[1024]{0}', space=vmem, size = 0x400, scoped, tag = 'output window, operand 0, single buffered']
    %9 = vsyncpa [#allocation4], 0
    %s10 = scalar_lea.sflag [#allocation4], 1
    %11 = vsyncpa %s10, 0
    %12 = vsyncpa [#allocation5], 0
    loop: start=0, step=1, limit=4
    $region2: #{tpu_custom_call.1} parent=1 // loop_pre_header
      _
    $region3: #{tpu_custom_call.1} parent=1 // loop_header
      %s14 = sphi 0, %s18
      %p15 = scmp.ge.s32.totalorder %s14, 4
      %s21 = sphi 0, %s33
      %s22 = sphi 0, %s29
      %s23 = sphi 0, %s21
      %s24 = sphi 0, %s22
      %s25 = sphi 0, %s23
      %s26 = sphi 0, %s24
      %s38 = sphi 0, %s40
      %s41 = sphi 0, %s38
      %s42 = sphi 0, %s41
      %s58 = sphi 0, %s42
      %s62 = sphi 0, %s62
      %s64 = sphi 0, %s62
      %s65 = sphi 0, %s64
      %s79 = sphi 0, %s65
      %s83 = sphi 0, %s83
      %s85 = sphi 0, %s83
      %s86 = sphi 0, %s85
      %s100 = sphi 0, %s86
      %s104 = sphi 0, %s104
      %s106 = sphi 0, %s104
      %s107 = sphi 0, %s106
      %s121 = sphi 0, %s107
      %s127 = sphi 0, %s129
      %s130 = sphi 0, %s127
      %s131 = sphi 0, %s130
      %s147 = sphi 0, %s131
    $region4: #{tpu_custom_call.1} parent=1 // loop_header_branch
      %17 = sbr.rel (%p15) target = $region8
    $region5: #{tpu_custom_call.1} parent=1 // loop_body
      %s19 = ssub.s32 %s14, 1
      %s20 = ssub.s32 %s14, 2
      %s27 = sadd.s32 1, %s22
      %p28 = scmp.ge.s32.totalorder %s27, 2
      %s29 = scalar_select %p28, 0, %s27
      %s30 = sadd.s32 1, %s21
      %s31 = scalar_select %p28, %s30, %s21
      %p32 = scmp.ge.s32.totalorder %s31, 1
      %s33 = scalar_select %p32, 0, %s31
      %s34 = ssub.s32 %s21, %s33
      %s35 = ssub.s32 %s22, %s29
      %s36 = sor.u32 %s34, %s35
      %p37 = scmp.eq.s32.totalorder %s36, 0
      %s39 = sadd.s32 %s38, 1
      %s40 = scalar_select %p37, %s38, %s39
      %p43 = pneg %p37
      %p44 = scmp.eq.s32.totalorder %s14, 1
      %p45 = por %p43, %p44
      %p46 = scmp.ne.s32.totalorder %s38, %s41
      %p47 = scmp.eq.s32.totalorder %s14, 0
      %p48 = por %p46, %p47
      %p49 = scmp.ne.s32.totalorder %s38, %s41
      %p50 = scmp.eq.s32.totalorder %s19, 1
      %p51 = por %p49, %p50
      %p52 = scmp.ne.s32.totalorder %s41, %s42
      %p53 = scmp.eq.s32.totalorder %s19, 0
      %p54 = por %p52, %p53
      %p55 = scmp.ne.s32.totalorder %s41, %s42
      %p56 = scmp.eq.s32.totalorder %s20, 1
      %p57 = por %p55, %p56
      %p59 = scmp.ne.s32.totalorder %s42, %s58
      %p60 = scmp.eq.s32.totalorder %s20, 0
      %p61 = por %p59, %p60
      %s63 = sadd.s32 %s62, 1
      %p66 = scmp.eq.s32.totalorder %s14, 1
      %p67 = scmp.ne.s32.totalorder %s62, %s64
      %p68 = scmp.eq.s32.totalorder %s14, 0
      %p69 = por %p67, %p68
      %p70 = scmp.ne.s32.totalorder %s62, %s64
      %p71 = scmp.eq.s32.totalorder %s19, 1
      %p72 = por %p70, %p71
      %p73 = scmp.ne.s32.totalorder %s64, %s65
      %p74 = scmp.eq.s32.totalorder %s19, 0
      %p75 = por %p73, %p74
      %p76 = scmp.ne.s32.totalorder %s64, %s65
      %p77 = scmp.eq.s32.totalorder %s20, 1
      %p78 = por %p76, %p77
      %p80 = scmp.ne.s32.totalorder %s65, %s79
      %p81 = scmp.eq.s32.totalorder %s20, 0
      %p82 = por %p80, %p81
      %s84 = sadd.s32 %s83, 1
      %p87 = scmp.eq.s32.totalorder %s14, 1
      %p88 = scmp.ne.s32.totalorder %s83, %s85
      %p89 = scmp.eq.s32.totalorder %s14, 0
      %p90 = por %p88, %p89
      %p91 = scmp.ne.s32.totalorder %s83, %s85
      %p92 = scmp.eq.s32.totalorder %s19, 1
      %p93 = por %p91, %p92
      %p94 = scmp.ne.s32.totalorder %s85, %s86
      %p95 = scmp.eq.s32.totalorder %s19, 0
      %p96 = por %p94, %p95
      %p97 = scmp.ne.s32.totalorder %s85, %s86
      %p98 = scmp.eq.s32.totalorder %s20, 1
      %p99 = por %p97, %p98
      %p101 = scmp.ne.s32.totalorder %s86, %s100
      %p102 = scmp.eq.s32.totalorder %s20, 0
      %p103 = por %p101, %p102
      %s105 = sadd.s32 %s104, 1
      %p108 = scmp.eq.s32.totalorder %s14, 1
      %p109 = scmp.ne.s32.totalorder %s104, %s106
      %p110 = scmp.eq.s32.totalorder %s14, 0
      %p111 = por %p109, %p110
      %p112 = scmp.ne.s32.totalorder %s104, %s106
      %p113 = scmp.eq.s32.totalorder %s19, 1
      %p114 = por %p112, %p113
      %p115 = scmp.ne.s32.totalorder %s106, %s107
      %p116 = scmp.eq.s32.totalorder %s19, 0
      %p117 = por %p115, %p116
      %p118 = scmp.ne.s32.totalorder %s106, %s107
      %p119 = scmp.eq.s32.totalorder %s20, 1
      %p120 = por %p118, %p119
      %p122 = scmp.ne.s32.totalorder %s107, %s121
      %p123 = scmp.eq.s32.totalorder %s20, 0
      %p124 = por %p122, %p123
      %s125 = ssub.s32 %s21, %s33
      %p126 = scmp.eq.s32.totalorder %s125, 0
      %s128 = sadd.s32 %s127, 1
      %s129 = scalar_select %p126, %s127, %s128
      %p132 = pneg %p126
      %p133 = scmp.eq.s32.totalorder %s14, 1
      %p134 = por %p132, %p133
      %p135 = scmp.ne.s32.totalorder %s127, %s130
      %p136 = scmp.eq.s32.totalorder %s14, 0
      %p137 = por %p135, %p136
      %p138 = scmp.ne.s32.totalorder %s127, %s130
      %p139 = scmp.eq.s32.totalorder %s19, 1
      %p140 = por %p138, %p139
      %p141 = scmp.ne.s32.totalorder %s130, %s131
      %p142 = scmp.eq.s32.totalorder %s19, 0
      %p143 = por %p141, %p142
      %p144 = scmp.ne.s32.totalorder %s130, %s131
      %p145 = scmp.eq.s32.totalorder %s20, 1
      %p146 = por %p144, %p145
      %p148 = scmp.ne.s32.totalorder %s131, %s147
      %p149 = scmp.eq.s32.totalorder %s20, 0
      %p150 = por %p148, %p149
      %p151 = scmp.le.s32.totalorder 1, %s14
      %p152 = scmp.lt.s32.totalorder %s14, 3
      %p153 = pnand %p151, %p152
      %p154 = pneg %p153
      // Predicated region
      $region9: #{tpu_custom_call.1} parent=5 // pred_check
        _
      $region10: #{tpu_custom_call.1} parent=5 // pred_check_branch
        %156 = sbr.rel (%p153) target = $region12
      $region11: #{tpu_custom_call.1} parent=5 // pred_region
        %s157 = ssub.s32 %s14, 1
        // Predicated region
        $region13: #{tpu_custom_call.1} parent=11 // pred_check
          %p158 = pneg %p75
        $region14: #{tpu_custom_call.1} parent=11 // pred_check_branch
          %160 = sbr.rel (%p158) target = $region16
        $region15: #{tpu_custom_call.1} parent=11 // pred_region
          _
        $region16: #{tpu_custom_call.1} parent=11 // pred_fallthru
          _
        // Predicated region
        $region17: #{tpu_custom_call.1} parent=11 // pred_check
          %p161 = pneg %p96
        $region18: #{tpu_custom_call.1} parent=11 // pred_check_branch
          %163 = sbr.rel (%p161) target = $region20
        $region19: #{tpu_custom_call.1} parent=11 // pred_region
          _
        $region20: #{tpu_custom_call.1} parent=11 // pred_fallthru
          _
        // Predicated region
        $region21: #{tpu_custom_call.1} parent=11 // pred_check
          %p164 = pneg %p117
        $region22: #{tpu_custom_call.1} parent=11 // pred_check_branch
          %166 = sbr.rel (%p164) target = $region24
        $region23: #{tpu_custom_call.1} parent=11 // pred_region
          _
        $region24: #{tpu_custom_call.1} parent=11 // pred_fallthru
          _
      $region12: #{tpu_custom_call.1} parent=5 // pred_fallthru
        _
      %p167 = scmp.lt.s32.totalorder %s14, 2
      // Predicated region
      $region25: #{tpu_custom_call.1} parent=5 // pred_check
        %p168 = pneg %p167
      $region26: #{tpu_custom_call.1} parent=5 // pred_check_branch
        %170 = sbr.rel (%p168) target = $region28
      $region27: #{tpu_custom_call.1} parent=5 // pred_region
        // Predicated region
        $region29: #{tpu_custom_call.1} parent=27 // pred_check
          %p171 = pneg %p48
        $region30: #{tpu_custom_call.1} parent=27 // pred_check_branch
          %173 = sbr.rel (%p171) target = $region32
        $region31: #{tpu_custom_call.1} parent=27 // pred_region
          %s174 = sand.u32 %s38, 1
          %s175 = scalar_lea.sflag [#allocation4], %s174
          %s176 = sand.u32 %s38, 1
          %s177 = smul.addr %s176, 8
          %s178 = scalar_lea.vmem [#allocation3], %s177
          %s179 = smul.u32 2, %s21
          %181 = vsyncadd %s175, 0
          %s182 = smul.addr %s179, 2
          %s183 = sadd.s32 %s22, %s182
          %s184 = smul.addr %s183, 4
          %s185 = scalar_lea.hbm %s0, %s184
          %s186 = sshll.u32 %s185, 4
          %s187 = int_to_ptr.hbm [resolvable:$true] %s186
          %s188 = sshll.u32 %s178, 4
          %s189 = int_to_ptr.vmem [resolvable:$true] %s188
          %194 = dma.hbm_to_vmem [thread:$0]  %s187, 128, %s189, %s175, 128, 64, 4
        $region32: #{tpu_custom_call.1} parent=27 // pred_fallthru
          _
      $region28: #{tpu_custom_call.1} parent=5 // pred_fallthru
        _
      %p195 = scmp.le.s32.totalorder 1, %s14
      %p196 = scmp.lt.s32.totalorder %s14, 3
      %p197 = pnand %p195, %p196
      %p198 = pneg %p197
      // Predicated region
      $region33: #{tpu_custom_call.1} parent=5 // pred_check
        _
      $region34: #{tpu_custom_call.1} parent=5 // pred_check_branch
        %200 = sbr.rel (%p197) target = $region36
      $region35: #{tpu_custom_call.1} parent=5 // pred_region
        %s201 = ssub.s32 %s14, 1
        %s202 = sand.u32 %s41, 1
        %s203 = scalar_lea.sflag [#allocation4], %s202
        %s204 = sand.u32 %s41, 1
        %s205 = smul.addr %s204, 8
        %s206 = scalar_lea.vmem [#allocation3], %s205
        // Predicated region
        $region37: #{tpu_custom_call.1} parent=35 // pred_check
          %p207 = pneg %p54
        $region38: #{tpu_custom_call.1} parent=35 // pred_check_branch
          %209 = sbr.rel (%p207) target = $region40
        $region39: #{tpu_custom_call.1} parent=35 // pred_region
          %211 = dma.done %s203, 128
        $region40: #{tpu_custom_call.1} parent=35 // pred_fallthru
          _
        %s212 = sand.u32 %s41, 1
        %s213 = scalar_lea.sflag [#allocation4], %s212
        %s214 = sand.u32 %s41, 1
        %s215 = smul.addr %s214, 8
        %s216 = scalar_lea.vmem [#allocation3], %s215
        %p217 = pneg %p54
        %p218 = pneg %p51
        %p219 = pneg %p75
        %p220 = pneg %p72
        %p221 = pneg %p96
        %p222 = pneg %p93
        %p223 = pneg %p117
        %p224 = pneg %p114
        %p225 = pneg %p143
        %p226 = pneg %p140
        %s227 = smul.u32 2, %s23
        %p228 = scmp.eq.s32.totalorder %s24, 0
        // Predicated region
        $region41: #{tpu_custom_call.1} parent=35 // pred_check
          %p229 = pneg %p228
        $region42: #{tpu_custom_call.1} parent=35 // pred_check_branch
          %231 = sbr.rel (%p229) target = $region44
        $region43: #{tpu_custom_call.1} parent=35 // pred_region
          %vm232 = vcmask 25600
          %233 = vst.msk [vmem:[#allocation2] sm:$0x3] %vm232, 0.0
        $region44: #{tpu_custom_call.1} parent=35 // pred_fallthru
          _
        %v234 = vld [vmem:[%s206] sm:$0xf]
        %v235 = vld [vmem:[%s206 + $0x4] sm:$0xf]
        %v236 = vld [vmem:[#allocation2] sm:$0x3]
        %vm237 = vcmask 1043456
        %v238 = vsel %vm237, %v234, 0.0
        %239 = vadd.xlane.f32.xlu0 %v238
        %v240 = vpop.xlane.xlu0 %239
        %v241 = vsel %vm237, %v235, 0.0
        %242 = vadd.xlane.f32.xlu0 %v241
        %v243 = vpop.xlane.xlu0 %242
        %v246 = vlaneseq
        %v247 = vand.u32 %v246, 127
        %v248 = vperm.slane %v240, %v247
        %v249 = vperm.slane %v243, %v247
        %vm250 = vcmask 1041409
        %v251 = vsel %vm250, %v249, %v248
        %v253 = vadd.f32 %v236, %v251
        %vm254 = vcmask 25600
        %255 = vst.msk [vmem:[#allocation2] sm:$0x3] %vm254, %v253
        %p256 = scmp.eq.s32.totalorder %s24, 1
        // Predicated region
        $region45: #{tpu_custom_call.1} parent=35 // pred_check
          %p257 = pneg %p256
        $region46: #{tpu_custom_call.1} parent=35 // pred_check_branch
          %259 = sbr.rel (%p257) target = $region48
        $region47: #{tpu_custom_call.1} parent=35 // pred_region
          %v260 = vld [vmem:[#allocation2] sm:$0x3]
          %v261 = vld [vmem:[%s1] sm:$0xf]
          %vm262 = vcmask 31744
          %v264 = vsel %vm262, %v260, 0
          %v267 = vsel %vm237, %v261, 0
          %269 = vmatpush.msra.mxu0 0.0
          %270 = vmatpush.msra.mxu0 0.0
          %271 = vmatpush.msra.mxu0 0.0
          %272 = vmatpush.msra.mxu0 0.0
          %273 = vmatpush.msra.mxu0 0.0
          %274 = vmatpush.msra.mxu0 0.0
          %275 = vmatpush.msra.mxu0 0.0
          %276 = vmatpush.msra.mxu0 0.0
          %277 = vmatpush.msra.mxu0 0.0
          %278 = vmatpush.msra.mxu0 0.0
          %279 = vmatpush.msra.mxu0 0.0
          %280 = vmatpush.msra.mxu0 0.0
          %281 = vmatpush.msra.mxu0 0.0
          %282 = vmatpush.msra.mxu0 0.0
          %283 = vmatpush.msra.mxu0 0.0
          %284 = vmatpush.msra.mxu0 %v267
          %285 = vmatmul.f32.gmra.mxu0 %v264
          %v286 = vpop.f32.mrf.mxu0
          %v287 = vadd.f32 0.0, %v286
          %288 = vdwg.mxu0
          %v289 = vmax.f32 %v287, 0.0
          %v290 = vld [vmem:[%s2] sm:$0x3]
          %v291 = vld [vmem:[%s3] sm:$0x1]
          %v293 = vperm.slane %v291, 0
          %vm295 = vcmask 15360
          %v297 = vsel %vm295, %v289, 0
          %vm299 = vcmask 1041408
          %v301 = vsel %vm299, %v290, 0
          %303 = vmatpush.msra.mxu0 0.0
          %304 = vmatpush.msra.mxu0 0.0
          %305 = vmatpush.msra.mxu0 0.0
          %306 = vmatpush.msra.mxu0 0.0
          %307 = vmatpush.msra.mxu0 0.0
          %308 = vmatpush.msra.mxu0 0.0
          %309 = vmatpush.msra.mxu0 0.0
          %310 = vmatpush.msra.mxu0 0.0
          %311 = vmatpush.msra.mxu0 0.0
          %312 = vmatpush.msra.mxu0 0.0
          %313 = vmatpush.msra.mxu0 0.0
          %314 = vmatpush.msra.mxu0 0.0
          %315 = vmatpush.msra.mxu0 0.0
          %316 = vmatpush.msra.mxu0 0.0
          %317 = vmatpush.msra.mxu0 0.0
          %318 = vmatpush.msra.mxu0 %v301
          %319 = vmatmul.f32.gmra.mxu0 %v297
          %v320 = vpop.f32.mrf.mxu0
          %v321 = vadd.f32 %v293, %v320
          %322 = vdwg.mxu0
          %v323 = vsel %vm254, %v321, -inf
          %324 = vmax.xlane.f32.xlu0 %v323
          %v325 = vpop.xlane.xlu0 %324
          %v326 = vsub.f32 %v321, %v325
          %v327 = vmul.f32 %v326, 1.442695
          %v328 = vpow.pop %v327
          %v329 = vsel %vm254, %v328, 0.0
          %330 = vadd.xlane.f32.xlu0 %v329
          %v331 = vpop.xlane.xlu0 %330
          %v332 = vrcp.pop %v331
          %v333 = vmul.f32 %v331, %v332
          %v334 = vsub.f32 1.0, %v333
          %v335 = vmul.f32 %v332, %v334
          %v336 = vadd.f32 %v332, %v335
          %vm337 = vweird.f32 %v331
          %vm338 = vweird.f32 %v332
          %vm339 = vmor %vm337, %vm338
          %v340 = vsel %vm339, %v332, %v336
          %v341 = vand.u32 2147483647, %v331
          %vm342 = vcmp.eq.f32.partialorder %v341, 8.507059e+37
          %v343 = vand.u32 %v331, 2147483648
          %v344 = vor.u32 1.1754944e-38, %v343
          %v345 = vsel %vm342, %v344, %v340
          %v346 = vmul.f32 %v328, %v345
          %347 = vst.msk [vmem:[#allocation6] sm:$0x3] %vm254, %v346
        $region48: #{tpu_custom_call.1} parent=35 // pred_fallthru
          _
        // Predicated region
        $region49: #{tpu_custom_call.1} parent=35 // pred_check
          %p348 = pneg %p140
        $region50: #{tpu_custom_call.1} parent=35 // pred_check_branch
          %350 = sbr.rel (%p348) target = $region52
        $region51: #{tpu_custom_call.1} parent=35 // pred_region
          %352 = vsyncadd [#allocation5], 0
          %s353 = smul.addr %s23, 2
          %s354 = scalar_lea.hbm %s4, %s353
          %s356 = sshll.u32 [#allocation6], 4
          %s357 = int_to_ptr.vmem [resolvable:$true] %s356
          %s358 = sshll.u32 %s354, 4
          %s359 = int_to_ptr.hbm [resolvable:$true] %s358
          %361 = dma.vmem_to_hbm [thread:$0]  %s357, 32, %s359, [#allocation5]
        $region52: #{tpu_custom_call.1} parent=35 // pred_fallthru
          _
        // Predicated region
        $region53: #{tpu_custom_call.1} parent=35 // pred_check
          %p362 = pneg %p140
        $region54: #{tpu_custom_call.1} parent=35 // pred_check_branch
          %364 = sbr.rel (%p362) target = $region56
        $region55: #{tpu_custom_call.1} parent=35 // pred_region
          %366 = dma.done [#allocation5], 32
        $region56: #{tpu_custom_call.1} parent=35 // pred_fallthru
          _
      $region36: #{tpu_custom_call.1} parent=5 // pred_fallthru
        _
      %p367 = scmp.le.s32.totalorder 2, %s14
      // Predicated region
      $region57: #{tpu_custom_call.1} parent=5 // pred_check
        %p368 = pneg %p367
      $region58: #{tpu_custom_call.1} parent=5 // pred_check_branch
        %370 = sbr.rel (%p368) target = $region60
      $region59: #{tpu_custom_call.1} parent=5 // pred_region
        %s371 = ssub.s32 %s14, 2
      $region60: #{tpu_custom_call.1} parent=5 // pred_fallthru
        _
    $region6: #{tpu_custom_call.1} parent=1 // loop_footer
      %s18 = sadd.s32 1, %s14
    $region7: #{tpu_custom_call.1} parent=1 // loop_footer_branch
      %13 = sbr.rel target = $region3
    $region8: #{tpu_custom_call.1} parent=1 // loop_exit
      _
    %372 = vsyncpa [#allocation4], 1
    %s373 = scalar_lea.sflag [#allocation4], 1
    %374 = vsyncpa %s373, 1
    %375 = vsyncpa [#allocation5], 1
    %s376 = scalar_lea.sflag [#allocation5], 1
    %377 = vsyncpa %s376, 1

</llo_original>
